<compile_context>
chip_gen: v7x
topology: tpu7x:2x2x1
jax: 0.10.0
libtpu: 0.0.40
codegen_flags: <defaults>
</compile_context>

<pallas_src>
import jax
import jax.numpy as jnp
from jax.experimental import pallas as pl
from jax.experimental.pallas import tpu as pltpu


def _round_up(n, m):
    return ((n + m - 1) // m) * m


def naive_weight_kernel(x_ref,
                        w13_ref, b13_ref,   # fused [W1 | W3], [b1 | b3]
                        w2_ref, b2_ref,     # weight branch: Linear(hidden, hidden)
                        w4_ref, b4_ref,     # tail: Linear(hidden, out_pad)
                        o_ref):
    x = x_ref[...]
    hidden = w2_ref.shape[0]

    # Fused first layer for both branches: x @ [W1 | W3] + [b1 | b3].
    h13 = jax.nn.sigmoid(
        jnp.dot(x, w13_ref[...], preferred_element_type=jnp.float32)
        + b13_ref[...])
    h1 = h13[:, :hidden]      # weight-branch hidden
    h = h13[:, hidden:]       # head-branch output

    # weight branch second layer: sigmoid(h1 @ W2 + b2)
    w = jax.nn.sigmoid(
        jnp.dot(h1, w2_ref[...], preferred_element_type=jnp.float32)
        + b2_ref[...])

    # gate + tail: sigmoid((h * w) @ W4 + b4)   (W4/b4 are lane-padded to 128)
    z = h * w
    o_ref[...] = jax.nn.sigmoid(
        jnp.dot(z, w4_ref[...], preferred_element_type=jnp.float32)
        + b4_ref[...])


def naive_weight_model(x, params, *, tb=None):
    """x: (B, in_feat) f32.  params: dict of (in,out)-layout weights/biases."""
    B, in_feat = x.shape
    hidden = params["w2"].shape[0]
    out_feat = params["w4"].shape[1]

    # Batch tile: fill the MXU M-dimension (256 covers v6e/v7x; still fine on
    # v5e), but never bigger than the (8-rounded) batch — at B=16 this gives a
    # single grid step, which keeps the whole serial matmul chain in one tile.
    if tb is None:
        tb = min(256, _round_up(B, 8))
    tb = max(8, _round_up(min(tb, _round_up(B, 8)), 8))

    # --- one-time wrapper-side parameter packing (free at runtime) ---------
    # Fuse the two matmuls that share x.
    w13 = jnp.concatenate([params["w1"], params["w3"]], axis=1)   # (in, 2*hidden)
    b13 = jnp.concatenate([params["b1"], params["b3"]], axis=1)   # (1, 2*hidden)
    # Lane-dense output: pad tail weight/bias (and hence output) to 128 lanes.
    out_pad = _round_up(out_feat, 128)
    w4p = jnp.pad(params["w4"], ((0, 0), (0, out_pad - out_feat)))
    b4p = jnp.pad(params["b4"], ((0, 0), (0, out_pad - out_feat)))

    grid = (pl.cdiv(B, tb),)

    x_spec = pl.BlockSpec((tb, in_feat), lambda i: (i, 0))
    o_spec = pl.BlockSpec((tb, out_pad), lambda i: (i, 0))

    # Parameters are small and grid-invariant: block == full array, constant
    # block index, so Pallas keeps them resident across batch grid steps.
    def full_spec(arr):
        return pl.BlockSpec(arr.shape, lambda i: (0,) * arr.ndim)

    packed = (w13, b13, params["w2"], params["b2"], w4p, b4p)
    param_specs = [full_spec(p) for p in packed]

    out_padded = pl.pallas_call(
        naive_weight_kernel,
        out_shape=jax.ShapeDtypeStruct((B, out_pad), jnp.float32),
        grid_spec=pltpu.PrefetchScalarGridSpec(
            num_scalar_prefetch=0,
            grid=grid,
            in_specs=[x_spec] + param_specs,
            out_specs=o_spec,
        ),
        compiler_params=pltpu.CompilerParams(
            dimension_semantics=("parallel",)),   # shards batch across TCs on v7x
    )(x, *packed)

    # Slice off the lane padding (sigmoid(0) columns) back to out_feat.
    return out_padded[:, :out_feat]


def init_params(key, in_feat, out_feat, hidden_feat):
    """Deterministic synthetic init (uniform, PyTorch-Linear-like ranges)."""
    ks = jax.random.split(key, 8)

    def lin(kw, kb, fan_in, fan_out):
        bound = 1.0 / jnp.sqrt(fan_in)
        w = jax.random.uniform(kw, (fan_in, fan_out), jnp.float32, -bound, bound)
        b = jax.random.uniform(kb, (1, fan_out), jnp.float32, -bound, bound)
        return w, b

    w1, b1 = lin(ks[0], ks[1], in_feat, hidden_feat)
    w2, b2 = lin(ks[2], ks[3], hidden_feat, hidden_feat)
    w3, b3 = lin(ks[4], ks[5], in_feat, hidden_feat)
    w4, b4 = lin(ks[6], ks[7], hidden_feat, out_feat)
    return {"w1": w1, "b1": b1, "w2": w2, "b2": b2,
            "w3": w3, "b3": b3, "w4": w4, "b4": b4}


def reference_forward(x, p):
    s = jax.nn.sigmoid
    w = s(s(x @ p["w1"] + p["b1"]) @ p["w2"] + p["b2"])
    h = s(x @ p["w3"] + p["b3"])
    return s((h * w) @ p["w4"] + p["b4"])


if __name__ == "__main__":
    B, in_feat, hidden_feat, out_feat = 16, 32, 32, 16

    key = jax.random.PRNGKey(0)
    kx, kp = jax.random.split(key)
    x = jax.random.normal(kx, (B, in_feat), dtype=jnp.float32)
    params = init_params(kp, in_feat, out_feat, hidden_feat)

    out = naive_weight_model(x, params)
    out = jax.block_until_ready(out)

    ref = reference_forward(x, params)
    assert out.shape == (B, out_feat)
    assert jnp.allclose(out, ref, atol=1e-5, rtol=1e-5)

    print("KERNEL_OK")
</pallas_src>

<mosaic_0001>
module attributes {stable_mosaic.version = 11 : i64} {
  func.func @naive_weight_kernel(%arg0: i32, %arg1: memref<16x32xf32, #tpu.memory_space<vmem>>, %arg2: memref<32x64xf32, #tpu.memory_space<vmem>>, %arg3: memref<1x64xf32, #tpu.memory_space<vmem>>, %arg4: memref<32x32xf32, #tpu.memory_space<vmem>>, %arg5: memref<1x32xf32, #tpu.memory_space<vmem>>, %arg6: memref<32x128xf32, #tpu.memory_space<vmem>>, %arg7: memref<1x128xf32, #tpu.memory_space<vmem>>, %arg8: memref<16x128xf32, #tpu.memory_space<vmem>>) attributes {dimension_semantics = [#tpu.dimension_semantics<parallel>], iteration_bounds = array<i64: 1>, scalar_prefetch = 0 : i64, scratch_operands = 0 : i64, tpu.core_type = #tpu.core_type<tc>, window_params = [{transform_indices = @transform_0, window_bounds = array<i64: 16, 32>}, {pipeline_mode = #tpu.pipeline_mode<synchronous>, transform_indices = @transform_1, window_bounds = array<i64: 32, 64>}, {pipeline_mode = #tpu.pipeline_mode<synchronous>, transform_indices = @transform_2, window_bounds = array<i64: 1, 64>}, {pipeline_mode = #tpu.pipeline_mode<synchronous>, transform_indices = @transform_3, window_bounds = array<i64: 32, 32>}, {pipeline_mode = #tpu.pipeline_mode<synchronous>, transform_indices = @transform_4, window_bounds = array<i64: 1, 32>}, {pipeline_mode = #tpu.pipeline_mode<synchronous>, transform_indices = @transform_5, window_bounds = array<i64: 32, 128>}, {pipeline_mode = #tpu.pipeline_mode<synchronous>, transform_indices = @transform_6, window_bounds = array<i64: 1, 128>}, {transform_indices = @transform_7, window_bounds = array<i64: 16, 128>}]} {
    %c0 = arith.constant 0 : index
    %c0_0 = arith.constant 0 : index
    %0 = vector.load %arg1[%c0, %c0_0] : memref<16x32xf32, #tpu.memory_space<vmem>>, vector<16x32xf32>
    %c0_1 = arith.constant 0 : index
    %c0_2 = arith.constant 0 : index
    %1 = vector.load %arg2[%c0_1, %c0_2] : memref<32x64xf32, #tpu.memory_space<vmem>>, vector<32x64xf32>
    %cst = arith.constant dense<0.000000e+00> : vector<16x64xf32>
    %2 = tpu.matmul %0, %1, %cst {dimension_numbers = #tpu.dot_dimension_numbers<[1], [0], [0], [1], [0, 0, 1, 1], [], []>} : vector<16x32xf32>, vector<32x64xf32>, vector<16x64xf32> -> vector<16x64xf32>
    %c0_3 = arith.constant 0 : index
    %c0_4 = arith.constant 0 : index
    %3 = vector.load %arg3[%c0_3, %c0_4] : memref<1x64xf32, #tpu.memory_space<vmem>>, vector<1x64xf32>
    %4 = vector.broadcast %3 : vector<1x64xf32> to vector<16x64xf32>
    %5 = arith.addf %2, %4 : vector<16x64xf32>
    %6 = arith.negf %5 : vector<16x64xf32>
    %7 = math.exp %6 : vector<16x64xf32>
    %cst_5 = arith.constant 1.000000e+00 : f32
    %8 = vector.broadcast %cst_5 : f32 to vector<16x64xf32>
    %9 = arith.addf %8, %7 : vector<16x64xf32>
    %10 = arith.divf %8, %9 : vector<16x64xf32>
    %11 = vector.extract_strided_slice %10 {offsets = [0, 0], sizes = [16, 32], strides = [1, 1]} : vector<16x64xf32> to vector<16x32xf32>
    %12 = vector.extract_strided_slice %10 {offsets = [0, 32], sizes = [16, 32], strides = [1, 1]} : vector<16x64xf32> to vector<16x32xf32>
    %c0_6 = arith.constant 0 : index
    %c0_7 = arith.constant 0 : index
    %13 = vector.load %arg4[%c0_6, %c0_7] : memref<32x32xf32, #tpu.memory_space<vmem>>, vector<32x32xf32>
    %cst_8 = arith.constant dense<0.000000e+00> : vector<16x32xf32>
    %14 = tpu.matmul %11, %13, %cst_8 {dimension_numbers = #tpu.dot_dimension_numbers<[1], [0], [0], [1], [0, 0, 1, 1], [], []>} : vector<16x32xf32>, vector<32x32xf32>, vector<16x32xf32> -> vector<16x32xf32>
    %c0_9 = arith.constant 0 : index
    %c0_10 = arith.constant 0 : index
    %15 = vector.load %arg5[%c0_9, %c0_10] : memref<1x32xf32, #tpu.memory_space<vmem>>, vector<1x32xf32>
    %16 = vector.broadcast %15 : vector<1x32xf32> to vector<16x32xf32>
    %17 = arith.addf %14, %16 : vector<16x32xf32>
    %18 = arith.negf %17 : vector<16x32xf32>
    %19 = math.exp %18 : vector<16x32xf32>
    %cst_11 = arith.constant 1.000000e+00 : f32
    %20 = vector.broadcast %cst_11 : f32 to vector<16x32xf32>
    %21 = arith.addf %20, %19 : vector<16x32xf32>
    %22 = arith.divf %20, %21 : vector<16x32xf32>
    %23 = arith.mulf %12, %22 : vector<16x32xf32>
    %c0_12 = arith.constant 0 : index
    %c0_13 = arith.constant 0 : index
    %24 = vector.load %arg6[%c0_12, %c0_13] : memref<32x128xf32, #tpu.memory_space<vmem>>, vector<32x128xf32>
    %cst_14 = arith.constant dense<0.000000e+00> : vector<16x128xf32>
    %25 = tpu.matmul %23, %24, %cst_14 {dimension_numbers = #tpu.dot_dimension_numbers<[1], [0], [0], [1], [0, 0, 1, 1], [], []>} : vector<16x32xf32>, vector<32x128xf32>, vector<16x128xf32> -> vector<16x128xf32>
    %c0_15 = arith.constant 0 : index
    %c0_16 = arith.constant 0 : index
    %26 = vector.load %arg7[%c0_15, %c0_16] : memref<1x128xf32, #tpu.memory_space<vmem>>, vector<1x128xf32>
    %27 = vector.broadcast %26 : vector<1x128xf32> to vector<16x128xf32>
    %28 = arith.addf %25, %27 : vector<16x128xf32>
    %29 = arith.negf %28 : vector<16x128xf32>
    %30 = math.exp %29 : vector<16x128xf32>
    %cst_17 = arith.constant 1.000000e+00 : f32
    %31 = vector.broadcast %cst_17 : f32 to vector<16x128xf32>
    %32 = arith.addf %31, %30 : vector<16x128xf32>
    %33 = arith.divf %31, %32 : vector<16x128xf32>
    %c0_18 = arith.constant 0 : index
    %c0_19 = arith.constant 0 : index
    %34 = vector.load %arg8[%c0_18, %c0_19] : memref<16x128xf32, #tpu.memory_space<vmem>>, vector<16x128xf32>
    tpu.vector_store %arg8[%c0_18, %c0_19], %33 {strides = array<i32>} : memref<16x128xf32, #tpu.memory_space<vmem>>, vector<16x128xf32>,
    return
  }
  func.func @transform_0(%arg0: i32) -> (i32, i32) {
    %c0_i32 = arith.constant 0 : i32
    %c0_i32_0 = arith.constant 0 : i32
    return %arg0, %c0_i32 : i32, i32
  }
  func.func @transform_1(%arg0: i32) -> (i32, i32) {
    %c0_i32 = arith.constant 0 : i32
    %c0_i32_0 = arith.constant 0 : i32
    %c0_i32_1 = arith.constant 0 : i32
    return %c0_i32, %c0_i32_0 : i32, i32
  }
  func.func @transform_2(%arg0: i32) -> (i32, i32) {
    %c0_i32 = arith.constant 0 : i32
    %c0_i32_0 = arith.constant 0 : i32
    %c0_i32_1 = arith.constant 0 : i32
    return %c0_i32, %c0_i32_0 : i32, i32
  }
  func.func @transform_3(%arg0: i32) -> (i32, i32) {
    %c0_i32 = arith.constant 0 : i32
    %c0_i32_0 = arith.constant 0 : i32
    %c0_i32_1 = arith.constant 0 : i32
    return %c0_i32, %c0_i32_0 : i32, i32
  }
  func.func @transform_4(%arg0: i32) -> (i32, i32) {
    %c0_i32 = arith.constant 0 : i32
    %c0_i32_0 = arith.constant 0 : i32
    %c0_i32_1 = arith.constant 0 : i32
    return %c0_i32, %c0_i32_0 : i32, i32
  }
  func.func @transform_5(%arg0: i32) -> (i32, i32) {
    %c0_i32 = arith.constant 0 : i32
    %c0_i32_0 = arith.constant 0 : i32
    %c0_i32_1 = arith.constant 0 : i32
    return %c0_i32, %c0_i32_0 : i32, i32
  }
  func.func @transform_6(%arg0: i32) -> (i32, i32) {
    %c0_i32 = arith.constant 0 : i32
    %c0_i32_0 = arith.constant 0 : i32
    %c0_i32_1 = arith.constant 0 : i32
    return %c0_i32, %c0_i32_0 : i32, i32
  }
  func.func @transform_7(%arg0: i32) -> (i32, i32) {
    %c0_i32 = arith.constant 0 : i32
    %c0_i32_0 = arith.constant 0 : i32
    return %arg0, %c0_i32 : i32, i32
  }
}

</mosaic_0001>

<llo_original>
// kernel: tpu_custom_call.1
$region0: #{tpu_custom_call.1}
  #allocation0 [shape = 'u32[]', space=smem, size = 0x4, offset = 0x4, fixed_abs, tag = 'smem constant byte address 0x4 - core index']
  #allocation1 [shape = 'u32[144,128]{1,0:T(1,128)}', space=vmem, size = 0x12000, scoped, tag = 'internal scratch']
  %s0 = inlined_call_operand.hbm [shape: f32[16,32], index: 0, kind: input, shape index: {}]
  %s1 = inlined_call_operand.hbm [shape: f32[32,64], index: 1, kind: input, shape index: {}]
  %s2 = inlined_call_operand.vmem [shape: f32[1,64], index: 2, kind: input, shape index: {}]
  %s3 = inlined_call_operand.hbm [shape: f32[32,32], index: 3, kind: input, shape index: {}]
  %s4 = inlined_call_operand.vmem [shape: f32[1,32], index: 4, kind: input, shape index: {}]
  %s5 = inlined_call_operand.hbm [shape: f32[32,128], index: 5, kind: input, shape index: {}]
  %s6 = inlined_call_operand.vmem [shape: f32[1,128], index: 6, kind: input, shape index: {}]
  %s7 = inlined_call_operand.hbm [shape: f32[16,128], index: 7, kind: output, shape index: {}]
  %s8 = sld [smem:[#allocation0]]
  $region54: #{tpu_custom_call.1} parent=0
    _
  %s10 = ssub.s32 1, %s8
  %s11 = scalar_select 0, %s10, %s8
  $region1: #{tpu_custom_call.1} parent=0
    #allocation2 [shape = 'u8[8192]{0}', space=vmem, size = 0x2000, scoped, tag = 'input window, operand 0, single buffered']
    #allocation3 [shape = 's32[1]{0}', space=sflag, size = 0x4, scoped, tag = 'scoped memory for tpu_custom_call.1']
    #allocation4 [shape = 's32[1]{0}', space=sflag, size = 0x4, scoped, tag = 'scoped memory for tpu_custom_call.1']
    #allocation5 [shape = 'u8[16384]{0}', space=vmem, size = 0x4000, scoped, tag = 'input window, operand 1, single buffered']
    #allocation6 [shape = 's32[1]{0}', space=sflag, size = 0x4, scoped, tag = 'scoped memory for tpu_custom_call.1']
    #allocation7 [shape = 'u8[16384]{0}', space=vmem, size = 0x4000, scoped, tag = 'input window, operand 3, single buffered']
    #allocation8 [shape = 'u8[16384]{0}', space=vmem, size = 0x4000, scoped, tag = 'input window, operand 5, single buffered']
    #allocation9 [shape = 's32[1]{0}', space=sflag, size = 0x4, scoped, tag = 'scoped memory for tpu_custom_call.1']
    #allocation10 [shape = 'u8[8192]{0}', space=vmem, size = 0x2000, scoped, tag = 'output window, operand 0, single buffered']
    %12 = vsyncpa [#allocation3], 0
    %13 = vsyncpa [#allocation6], 0
    %14 = vsyncpa [#allocation9], 0
    %15 = vsyncpa [#allocation4], 0
    // Predicated region
    $region2: #{tpu_custom_call.1} parent=1 // pred_check
      _
    $region3: #{tpu_custom_call.1} parent=1 // pred_check_branch
      %17 = sbr.rel (0) target = $region5
    $region4: #{tpu_custom_call.1} parent=1 // pred_region
      %s19 = ssub.s32 256, 256
      %20 = vsyncadd [#allocation3], %s19
      %s21 = sshll.u32 [#allocation2], 4
      %s22 = int_to_ptr.vmem [resolvable:$true] %s21
      %27 = dma.hbm_to_vmem [thread:$0]  %s0, 256, %s22, [#allocation3], 128, 128, 8
    $region5: #{tpu_custom_call.1} parent=1 // pred_fallthru
      _
    // Predicated region
    $region6: #{tpu_custom_call.1} parent=1 // pred_check
      _
    $region7: #{tpu_custom_call.1} parent=1 // pred_check_branch
      %29 = sbr.rel (0) target = $region9
    $region8: #{tpu_custom_call.1} parent=1 // pred_region
      %s31 = ssub.s32 512, 512
      %32 = vsyncadd [#allocation6], %s31
      %s33 = sshll.u32 [#allocation5], 4
      %s34 = int_to_ptr.vmem [resolvable:$true] %s33
      %39 = dma.hbm_to_vmem [thread:$0]  %s1, 512, %s34, [#allocation6], 128, 128, 8
    $region9: #{tpu_custom_call.1} parent=1 // pred_fallthru
      _
    // Predicated region
    $region10: #{tpu_custom_call.1} parent=1 // pred_check
      _
    $region11: #{tpu_custom_call.1} parent=1 // pred_check_branch
      %41 = sbr.rel (0) target = $region13
    $region12: #{tpu_custom_call.1} parent=1 // pred_region
      _
    $region13: #{tpu_custom_call.1} parent=1 // pred_fallthru
      _
    // Predicated region
    $region14: #{tpu_custom_call.1} parent=1 // pred_check
      _
    $region15: #{tpu_custom_call.1} parent=1 // pred_check_branch
      %43 = sbr.rel (0) target = $region17
    $region16: #{tpu_custom_call.1} parent=1 // pred_region
      %s45 = ssub.s32 512, 512
      %46 = vsyncadd [#allocation6], %s45
      %s47 = sshll.u32 [#allocation7], 4
      %s48 = int_to_ptr.vmem [resolvable:$true] %s47
      %53 = dma.hbm_to_vmem [thread:$0]  %s3, 512, %s48, [#allocation6], 128, 128, 8
    $region17: #{tpu_custom_call.1} parent=1 // pred_fallthru
      _
    // Predicated region
    $region18: #{tpu_custom_call.1} parent=1 // pred_check
      _
    $region19: #{tpu_custom_call.1} parent=1 // pred_check_branch
      %55 = sbr.rel (0) target = $region21
    $region20: #{tpu_custom_call.1} parent=1 // pred_region
      _
    $region21: #{tpu_custom_call.1} parent=1 // pred_fallthru
      _
    // Predicated region
    $region22: #{tpu_custom_call.1} parent=1 // pred_check
      _
    $region23: #{tpu_custom_call.1} parent=1 // pred_check_branch
      %57 = sbr.rel (0) target = $region25
    $region24: #{tpu_custom_call.1} parent=1 // pred_region
      %s59 = ssub.s32 512, 512
      %60 = vsyncadd [#allocation9], %s59
      %s61 = sshll.u32 [#allocation8], 4
      %s62 = int_to_ptr.vmem [resolvable:$true] %s61
      %67 = dma.hbm_to_vmem [thread:$0]  %s5, 512, %s62, [#allocation9], 128, 128, 8
    $region25: #{tpu_custom_call.1} parent=1 // pred_fallthru
      _
    // Predicated region
    $region26: #{tpu_custom_call.1} parent=1 // pred_check
      _
    $region27: #{tpu_custom_call.1} parent=1 // pred_check_branch
      %69 = sbr.rel (0) target = $region29
    $region28: #{tpu_custom_call.1} parent=1 // pred_region
      _
    $region29: #{tpu_custom_call.1} parent=1 // pred_fallthru
      _
    // Predicated region
    $region30: #{tpu_custom_call.1} parent=1 // pred_check
      _
    $region31: #{tpu_custom_call.1} parent=1 // pred_check_branch
      %71 = sbr.rel (0) target = $region33
    $region32: #{tpu_custom_call.1} parent=1 // pred_region
      %72 = dma.done [#allocation3], 256
    $region33: #{tpu_custom_call.1} parent=1 // pred_fallthru
      _
    // Predicated region
    $region34: #{tpu_custom_call.1} parent=1 // pred_check
      _
    $region35: #{tpu_custom_call.1} parent=1 // pred_check_branch
      %74 = sbr.rel (0) target = $region37
    $region36: #{tpu_custom_call.1} parent=1 // pred_region
      %75 = dma.done [#allocation6], 512
    $region37: #{tpu_custom_call.1} parent=1 // pred_fallthru
      _
    // Predicated region
    $region38: #{tpu_custom_call.1} parent=1 // pred_check
      _
    $region39: #{tpu_custom_call.1} parent=1 // pred_check_branch
      %77 = sbr.rel (0) target = $region41
    $region40: #{tpu_custom_call.1} parent=1 // pred_region
      %78 = dma.done [#allocation6], 512
    $region41: #{tpu_custom_call.1} parent=1 // pred_fallthru
      _
    // Predicated region
    $region42: #{tpu_custom_call.1} parent=1 // pred_check
      _
    $region43: #{tpu_custom_call.1} parent=1 // pred_check_branch
      %80 = sbr.rel (0) target = $region45
    $region44: #{tpu_custom_call.1} parent=1 // pred_region
      %81 = dma.done [#allocation9], 512
    $region45: #{tpu_custom_call.1} parent=1 // pred_fallthru
      _
    %v82 = vld [vmem:[#allocation2] sm:$0xff]
    %v83 = vld [vmem:[#allocation2 + $0x8] sm:$0xff]
    %v84 = vld [vmem:[#allocation5] sm:$0xff]
    %v85 = vld [vmem:[#allocation5 + $0x8] sm:$0xff]
    %v86 = vld [vmem:[#allocation5 + $0x10] sm:$0xff]
    %v87 = vld [vmem:[#allocation5 + $0x18] sm:$0xff]
    %v88 = vld [vmem:[%s2] sm:$0x1]
    %v90 = vlaneseq
    %v91 = vshrl.u32 %v90, 7
    %v92 = vsub.s32 0, %v91
    %v93 = vrot.slane %v88, %v92
    %vm95 = vcmask 261120
    %v97 = vsel %vm95, %v82, 0
    %v100 = vsel %vm95, %v83, 0
    %102 = vmatprep.subr.mxu0 0.0
    %103 = vmatpush1.msra.mxu0 %v84
    %104 = vmatprep.subr.mxu0 0.0
    %105 = vmatpush1.msra.mxu0 %v85
    %106 = vmatprep.subr.mxu0 0.0
    %107 = vmatpush1.msra.mxu0 %v86
    %108 = vmatprep.subr.mxu0 0.0
    %109 = vmatpush1.msra.mxu0 %v87
    %110 = vmatprep.subr.mxu0 0.0
    %111 = vmatpush1.msra.mxu0 0.0
    %112 = vmatprep.subr.mxu0 0.0
    %113 = vmatpush1.msra.mxu0 0.0
    %114 = vmatprep.subr.mxu0 0.0
    %115 = vmatpush1.msra.mxu0 0.0
    %116 = vmatprep.subr.mxu0 0.0
    %117 = vmatpush1.msra.mxu0 0.0
    %118 = vmatprep.subr.mxu0 0.0
    %119 = vmatpush1.msra.mxu0 0.0
    %120 = vmatprep.subr.mxu0 0.0
    %121 = vmatpush1.msra.mxu0 0.0
    %122 = vmatprep.subr.mxu0 0.0
    %123 = vmatpush1.msra.mxu0 0.0
    %124 = vmatprep.subr.mxu0 0.0
    %125 = vmatpush1.msra.mxu0 0.0
    %126 = vmatprep.subr.mxu0 0.0
    %127 = vmatpush1.msra.mxu0 0.0
    %128 = vmatprep.subr.mxu0 0.0
    %129 = vmatpush1.msra.mxu0 0.0
    %130 = vmatprep.subr.mxu0 0.0
    %131 = vmatpush1.msra.mxu0 0.0
    %132 = vmatprep.subr.mxu0 0.0
    %133 = vmatpush1.msra.mxu0 0.0
    %134 = vmatprep.subr.mxu0 0.0
    %135 = vmatpush1.msra.mxu0 0.0
    %136 = vmatprep.subr.mxu0 0.0
    %137 = vmatpush1.msra.mxu0 0.0
    %138 = vmatprep.subr.mxu0 0.0
    %139 = vmatpush1.msra.mxu0 0.0
    %140 = vmatprep.subr.mxu0 0.0
    %141 = vmatpush1.msra.mxu0 0.0
    %142 = vmatprep.subr.mxu0 0.0
    %143 = vmatpush1.msra.mxu0 0.0
    %144 = vmatprep.subr.mxu0 0.0
    %145 = vmatpush1.msra.mxu0 0.0
    %146 = vmatprep.subr.mxu0 0.0
    %147 = vmatpush1.msra.mxu0 0.0
    %148 = vmatprep.subr.mxu0 0.0
    %149 = vmatpush1.msra.mxu0 0.0
    %150 = vmatprep.subr.mxu0 0.0
    %151 = vmatpush1.msra.mxu0 0.0
    %152 = vmatprep.subr.mxu0 0.0
    %153 = vmatpush1.msra.mxu0 0.0
    %154 = vmatprep.subr.mxu0 0.0
    %155 = vmatpush1.msra.mxu0 0.0
    %156 = vmatprep.subr.mxu0 0.0
    %157 = vmatpush1.msra.mxu0 0.0
    %158 = vmatprep.subr.mxu0 0.0
    %159 = vmatpush1.msra.mxu0 0.0
    %160 = vmatprep.subr.mxu0 0.0
    %161 = vmatpush1.msra.mxu0 0.0
    %162 = vmatprep.subr.mxu0 0.0
    %163 = vmatpush1.msra.mxu0 0.0
    %164 = vmatprep.subr.mxu0 0.0
    %165 = vmatpush1.msra.mxu0 0.0
    %166 = vmatprep.mubr.f32.mxu0 0.0
    %167 = vmatmul.mubr.f32.gmra.mrb[0].mxu0 %v97
    %v168 = vpop.f32.mrb[0].mxu0
    %v169 = vadd.f32 %v93, %v168
    %v170 = vpop.f32.mrb[0].mxu0
    %171 = vmatprep.mubr.f32.mxu0 0.0
    %172 = vmatmul.mubr.f32.gmra.mrb[0].mxu0 %v100
    %v173 = vpop.f32.mrb[0].mxu0
    %v174 = vadd.f32 %v93, %v173
    %v175 = vpop.f32.mrb[0].mxu0
    %176 = vdwg.mxu0
    %v177 = vxor.u32 %v169, 2147483648
    %v178 = vxor.u32 %v174, 2147483648
    %v179 = vmul.f32 %v177, 1.442695
    %v180 = vpow.pop %v179
    %v181 = vmul.f32 %v178, 1.442695
    %v182 = vpow.pop %v181
    %v183 = vadd.f32 %v180, 1.0
    %v184 = vadd.f32 %v182, 1.0
    %v185 = vrcp.pop %v183
    %v186 = vmul.f32 1.0, %v185
    %v187 = vrcp.pop %v184
    %v188 = vmul.f32 1.0, %v187
    %v189 = vld [vmem:[#allocation7] sm:$0xff]
    %v190 = vld [vmem:[#allocation7 + $0x8] sm:$0xff]
    %v191 = vld [vmem:[#allocation7 + $0x10] sm:$0xff]
    %v192 = vld [vmem:[#allocation7 + $0x18] sm:$0xff]
    %v193 = vld [vmem:[%s4] sm:$0x1]
    %v195 = vlaneseq
    %v196 = vshrl.u32 %v195, 7
    %v197 = vsub.s32 0, %v196
    %v198 = vrot.slane %v193, %v197
    %v201 = vsel %vm95, %v186, 0
    %v204 = vsel %vm95, %v188, 0
    %206 = vmatprep.subr.mxu0 0.0
    %207 = vmatpush1.msra.mxu0 %v189
    %208 = vmatprep.subr.mxu0 0.0
    %209 = vmatpush1.msra.mxu0 %v190
    %210 = vmatprep.subr.mxu0 0.0
    %211 = vmatpush1.msra.mxu0 %v191
    %212 = vmatprep.subr.mxu0 0.0
    %213 = vmatpush1.msra.mxu0 %v192
    %214 = vmatprep.subr.mxu0 0.0
    %215 = vmatpush1.msra.mxu0 0.0
    %216 = vmatprep.subr.mxu0 0.0
    %217 = vmatpush1.msra.mxu0 0.0
    %218 = vmatprep.subr.mxu0 0.0
    %219 = vmatpush1.msra.mxu0 0.0
    %220 = vmatprep.subr.mxu0 0.0
    %221 = vmatpush1.msra.mxu0 0.0
    %222 = vmatprep.subr.mxu0 0.0
    %223 = vmatpush1.msra.mxu0 0.0
    %224 = vmatprep.subr.mxu0 0.0
    %225 = vmatpush1.msra.mxu0 0.0
    %226 = vmatprep.subr.mxu0 0.0
    %227 = vmatpush1.msra.mxu0 0.0
    %228 = vmatprep.subr.mxu0 0.0
    %229 = vmatpush1.msra.mxu0 0.0
    %230 = vmatprep.subr.mxu0 0.0
    %231 = vmatpush1.msra.mxu0 0.0
    %232 = vmatprep.subr.mxu0 0.0
    %233 = vmatpush1.msra.mxu0 0.0
    %234 = vmatprep.subr.mxu0 0.0
    %235 = vmatpush1.msra.mxu0 0.0
    %236 = vmatprep.subr.mxu0 0.0
    %237 = vmatpush1.msra.mxu0 0.0
    %238 = vmatprep.subr.mxu0 0.0
    %239 = vmatpush1.msra.mxu0 0.0
    %240 = vmatprep.subr.mxu0 0.0
    %241 = vmatpush1.msra.mxu0 0.0
    %242 = vmatprep.subr.mxu0 0.0
    %243 = vmatpush1.msra.mxu0 0.0
    %244 = vmatprep.subr.mxu0 0.0
    %245 = vmatpush1.msra.mxu0 0.0
    %246 = vmatprep.subr.mxu0 0.0
    %247 = vmatpush1.msra.mxu0 0.0
    %248 = vmatprep.subr.mxu0 0.0
    %249 = vmatpush1.msra.mxu0 0.0
    %250 = vmatprep.subr.mxu0 0.0
    %251 = vmatpush1.msra.mxu0 0.0
    %252 = vmatprep.subr.mxu0 0.0
    %253 = vmatpush1.msra.mxu0 0.0
    %254 = vmatprep.subr.mxu0 0.0
    %255 = vmatpush1.msra.mxu0 0.0
    %256 = vmatprep.subr.mxu0 0.0
    %257 = vmatpush1.msra.mxu0 0.0
    %258 = vmatprep.subr.mxu0 0.0
    %259 = vmatpush1.msra.mxu0 0.0
    %260 = vmatprep.subr.mxu0 0.0
    %261 = vmatpush1.msra.mxu0 0.0
    %262 = vmatprep.subr.mxu0 0.0
    %263 = vmatpush1.msra.mxu0 0.0
    %264 = vmatprep.subr.mxu0 0.0
    %265 = vmatpush1.msra.mxu0 0.0
    %266 = vmatprep.subr.mxu0 0.0
    %267 = vmatpush1.msra.mxu0 0.0
    %268 = vmatprep.subr.mxu0 0.0
    %269 = vmatpush1.msra.mxu0 0.0
    %270 = vmatprep.mubr.f32.mxu0 0.0
    %271 = vmatmul.mubr.f32.gmra.mrb[0].mxu0 %v201
    %v272 = vpop.f32.mrb[0].mxu0
    %v273 = vadd.f32 %v198, %v272
    %v274 = vpop.f32.mrb[0].mxu0
    %275 = vmatprep.mubr.f32.mxu0 0.0
    %276 = vmatmul.mubr.f32.gmra.mrb[0].mxu0 %v204
    %v277 = vpop.f32.mrb[0].mxu0
    %v278 = vadd.f32 %v198, %v277
    %v279 = vpop.f32.mrb[0].mxu0
    %280 = vdwg.mxu0
    %v281 = vxor.u32 %v273, 2147483648
    %v282 = vxor.u32 %v278, 2147483648
    %v283 = vmul.f32 %v281, 1.442695
    %v284 = vpow.pop %v283
    %v285 = vmul.f32 %v282, 1.442695
    %v286 = vpow.pop %v285
    %v287 = vadd.f32 %v284, 1.0
    %v288 = vadd.f32 %v286, 1.0
    %v289 = vrcp.pop %v287
    %v290 = vmul.f32 1.0, %v289
    %v291 = vrcp.pop %v288
    %v292 = vmul.f32 1.0, %v291
    %295 = vrot.lane.b32.xlu0 %v290, 32
    %v296 = vpop.permute.xlu0 %295
    %297 = vrot.lane.b32.xlu0 %v292, 32
    %v298 = vpop.permute.xlu0 %297
    %v301 = vmul.f32 %v186, %v296
    %v302 = vmul.f32 %v188, %v298
    %v303 = vld [vmem:[#allocation8] sm:$0xff]
    %v304 = vld [vmem:[#allocation8 + $0x8] sm:$0xff]
    %v305 = vld [vmem:[#allocation8 + $0x10] sm:$0xff]
    %v306 = vld [vmem:[#allocation8 + $0x18] sm:$0xff]
    %v307 = vld [vmem:[%s6] sm:$0x1]
    %v309 = vlaneseq
    %v310 = vshrl.u32 %v309, 7
    %v311 = vsub.s32 0, %v310
    %v312 = vrot.slane %v307, %v311
    %316 = vrot.lane.b32.xlu0 %v301, 96
    %v317 = vpop.permute.xlu0 %316
    %318 = vrot.lane.b32.xlu0 %v302, 96
    %v319 = vpop.permute.xlu0 %318
    %v320 = vsel %vm95, %v317, 0
    %v322 = vsel %vm95, %v319, 0
    %324 = vmatprep.subr.mxu0 0.0
    %325 = vmatpush1.msra.mxu0 %v303
    %326 = vmatprep.subr.mxu0 0.0
    %327 = vmatpush1.msra.mxu0 %v304
    %328 = vmatprep.subr.mxu0 0.0
    %329 = vmatpush1.msra.mxu0 %v305
    %330 = vmatprep.subr.mxu0 0.0
    %331 = vmatpush1.msra.mxu0 %v306
    %332 = vmatprep.subr.mxu0 0.0
    %333 = vmatpush1.msra.mxu0 0.0
    %334 = vmatprep.subr.mxu0 0.0
    %335 = vmatpush1.msra.mxu0 0.0
    %336 = vmatprep.subr.mxu0 0.0
    %337 = vmatpush1.msra.mxu0 0.0
    %338 = vmatprep.subr.mxu0 0.0
    %339 = vmatpush1.msra.mxu0 0.0
    %340 = vmatprep.subr.mxu0 0.0
    %341 = vmatpush1.msra.mxu0 0.0
    %342 = vmatprep.subr.mxu0 0.0
    %343 = vmatpush1.msra.mxu0 0.0
    %344 = vmatprep.subr.mxu0 0.0
    %345 = vmatpush1.msra.mxu0 0.0
    %346 = vmatprep.subr.mxu0 0.0
    %347 = vmatpush1.msra.mxu0 0.0
    %348 = vmatprep.subr.mxu0 0.0
    %349 = vmatpush1.msra.mxu0 0.0
    %350 = vmatprep.subr.mxu0 0.0
    %351 = vmatpush1.msra.mxu0 0.0
    %352 = vmatprep.subr.mxu0 0.0
    %353 = vmatpush1.msra.mxu0 0.0
    %354 = vmatprep.subr.mxu0 0.0
    %355 = vmatpush1.msra.mxu0 0.0
    %356 = vmatprep.subr.mxu0 0.0
    %357 = vmatpush1.msra.mxu0 0.0
    %358 = vmatprep.subr.mxu0 0.0
    %359 = vmatpush1.msra.mxu0 0.0
    %360 = vmatprep.subr.mxu0 0.0
    %361 = vmatpush1.msra.mxu0 0.0
    %362 = vmatprep.subr.mxu0 0.0
    %363 = vmatpush1.msra.mxu0 0.0
    %364 = vmatprep.subr.mxu0 0.0
    %365 = vmatpush1.msra.mxu0 0.0
    %366 = vmatprep.subr.mxu0 0.0
    %367 = vmatpush1.msra.mxu0 0.0
    %368 = vmatprep.subr.mxu0 0.0
    %369 = vmatpush1.msra.mxu0 0.0
    %370 = vmatprep.subr.mxu0 0.0
    %371 = vmatpush1.msra.mxu0 0.0
    %372 = vmatprep.subr.mxu0 0.0
    %373 = vmatpush1.msra.mxu0 0.0
    %374 = vmatprep.subr.mxu0 0.0
    %375 = vmatpush1.msra.mxu0 0.0
    %376 = vmatprep.subr.mxu0 0.0
    %377 = vmatpush1.msra.mxu0 0.0
    %378 = vmatprep.subr.mxu0 0.0
    %379 = vmatpush1.msra.mxu0 0.0
    %380 = vmatprep.subr.mxu0 0.0
    %381 = vmatpush1.msra.mxu0 0.0
    %382 = vmatprep.subr.mxu0 0.0
    %383 = vmatpush1.msra.mxu0 0.0
    %384 = vmatprep.subr.mxu0 0.0
    %385 = vmatpush1.msra.mxu0 0.0
    %386 = vmatprep.subr.mxu0 0.0
    %387 = vmatpush1.msra.mxu0 0.0
    %388 = vmatprep.mubr.f32.mxu0 0.0
    %389 = vmatmul.mubr.f32.gmra.mrb[0].mxu0 %v320
    %v390 = vpop.f32.mrb[0].mxu0
    %v391 = vadd.f32 %v312, %v390
    %v392 = vpop.f32.mrb[0].mxu0
    %393 = vmatprep.mubr.f32.mxu0 0.0
    %394 = vmatmul.mubr.f32.gmra.mrb[0].mxu0 %v322
    %v395 = vpop.f32.mrb[0].mxu0
    %v396 = vadd.f32 %v312, %v395
    %v397 = vpop.f32.mrb[0].mxu0
    %398 = vdwg.mxu0
    %v399 = vxor.u32 %v391, 2147483648
    %v400 = vxor.u32 %v396, 2147483648
    %v401 = vmul.f32 %v399, 1.442695
    %v402 = vpow.pop %v401
    %v403 = vmul.f32 %v400, 1.442695
    %v404 = vpow.pop %v403
    %v405 = vadd.f32 %v402, 1.0
    %v406 = vadd.f32 %v404, 1.0
    %v407 = vrcp.pop %v405
    %v408 = vmul.f32 1.0, %v407
    %v409 = vrcp.pop %v406
    %v410 = vmul.f32 1.0, %v409
    %411 = vst [vmem:[#allocation10] sm:$0xff] %v408
    %412 = vst [vmem:[#allocation10 + $0x8] sm:$0xff] %v410
    // Predicated region
    $region46: #{tpu_custom_call.1} parent=1 // pred_check
      _
    $region47: #{tpu_custom_call.1} parent=1 // pred_check_branch
      %414 = sbr.rel (0) target = $region49
    $region48: #{tpu_custom_call.1} parent=1 // pred_region
      %s416 = ssub.s32 256, 256
      %417 = vsyncadd [#allocation4], %s416
      %s418 = sshll.u32 [#allocation10], 4
      %s419 = int_to_ptr.vmem [resolvable:$true] %s418
      %424 = dma.vmem_to_hbm [thread:$0]  %s419, 256, %s7, [#allocation4], 128, 128, 8
    $region49: #{tpu_custom_call.1} parent=1 // pred_fallthru
      _
    // Predicated region
    $region50: #{tpu_custom_call.1} parent=1 // pred_check
      _
    $region51: #{tpu_custom_call.1} parent=1 // pred_check_branch
      %426 = sbr.rel (0) target = $region53
    $region52: #{tpu_custom_call.1} parent=1 // pred_region
      %427 = dma.done [#allocation4], 256
    $region53: #{tpu_custom_call.1} parent=1 // pred_fallthru
      _
    %428 = vsyncpa [#allocation3], 1
    %429 = vsyncpa [#allocation6], 1
    %430 = vsyncpa [#allocation9], 1
    %431 = vsyncpa [#allocation4], 1

</llo_original>
